<compile_context>
chip_gen: v7x
topology: tpu7x:2x2x1
jax: 0.10.0
libtpu: 0.0.40
codegen_flags: <defaults>
</compile_context>

<pallas_src>
import jax
import jax.numpy as jnp
from jax.experimental import pallas as pl
from jax.experimental.pallas import tpu as pltpu


def _round_up(x, m):
    return (x + m - 1) // m * m


# ---------------------------------------------------------------------------
# Kernel body
# ---------------------------------------------------------------------------
def _vae_encoder_kernel(x_ref, w1t_ref, b1_ref, wht_ref, bh_ref,
                        out_ref, acc_ref):
    k = pl.program_id(1)

    @pl.when(k == 0)
    def _():
        acc_ref[...] = jnp.zeros_like(acc_ref)

    # fc1 partial product for this K slab.  x arrives as f32; the cast to the
    # MXU compute dtype is a VPU op hidden under the DMA of the next slab.
    acc_ref[...] += jnp.dot(x_ref[...].astype(w1t_ref.dtype), w1t_ref[...],
                            preferred_element_type=jnp.float32)

    @pl.when(k == pl.num_programs(1) - 1)
    def _():
        h1 = acc_ref[...] + b1_ref[...]                      # f32 bias add
        # Fused fc_mu|fc_var head, kept in f32 (tiny: K = h_pad = 128) so h1 is
        # never re-rounded to bf16; one lane-dense (tile_n, out_pad) store.
        out_ref[...] = (jnp.dot(h1, wht_ref[...],
                                preferred_element_type=jnp.float32)
                        + bh_ref[...]).astype(out_ref.dtype)


# ---------------------------------------------------------------------------
# One-time parameter preparation (hoisted out of the hot path)
# ---------------------------------------------------------------------------
def prepare_encoder_params(w1, b1, w_mu, b_mu, w_var, b_var,
                           *, compute_dtype=jnp.bfloat16):
    """Transpose/pad/cast the weights once; cache the result across calls."""
    hidden, f = w1.shape                 # hidden = 2E, f = 3*img*img
    enc = w_mu.shape[0]                  # E
    f_pad = _round_up(f, 128)
    h_pad = _round_up(hidden, 128)       # lane-dense hidden
    out_pad = _round_up(2 * enc, 128)    # lane-dense merged mu|var output

    # fc1 weight pre-transposed to (F, H): kernel never transposes on-chip.
    w1t = jnp.zeros((f_pad, h_pad), compute_dtype).at[:f, :hidden].set(
        w1.T.astype(compute_dtype))
    b1_p = jnp.zeros((1, h_pad), jnp.float32).at[0, :hidden].set(b1)
    # fc_mu / fc_var fused into one pre-transposed f32 head (H, 2E).
    w_head = jnp.concatenate([w_mu, w_var], axis=0)          # (2E, H)
    wht = jnp.zeros((h_pad, out_pad), jnp.float32).at[:hidden, :2 * enc].set(
        w_head.T.astype(jnp.float32))
    bh_p = jnp.zeros((1, out_pad), jnp.float32).at[0, :2 * enc].set(
        jnp.concatenate([b_mu, b_var], axis=0))
    return dict(w1t=w1t, b1=b1_p, wht=wht, bh=bh_p,
                f=f, hidden=hidden, enc=enc)


# ---------------------------------------------------------------------------
# Forward pass
# ---------------------------------------------------------------------------
_VMEM_LIMIT_BYTES = 48 * 1024 * 1024   # fits v7x's 64 MiB physical VMEM
_TILE_BUDGET_BYTES = 40 * 1024 * 1024  # headroom for Mosaic internal scratch


def _vmem_bytes(tile_n, tile_k, h_pad, out_pad):
    return (tile_n * tile_k * 4 * 2                       # f32 x tile, x2 buffers
            + tile_k * h_pad * 2 * 2                      # bf16 w1^T slab, x2
            + (h_pad * out_pad + h_pad + out_pad) * 4 * 2  # head consts, x2
            + tile_n * h_pad * 4                          # f32 accumulator
            + tile_n * out_pad * 4 * 2)                   # output tile, x2


def vae_encoder_fwd(x, params, *, tile_n=256, max_tile_k=8192):
    """x: (N, 3*img*img) f32. Returns (mu, logvar), each (N, E) f32."""
    n, f = x.shape
    assert f == params['f']
    enc = params['enc']
    w1t, b1_p, wht, bh_p = params['w1t'], params['b1'], params['wht'], params['bh']
    f_pad, h_pad = w1t.shape
    out_pad = wht.shape[1]

    # Batch tile: 16-aligned (bf16 sublane packing); >= 2 tiles once n >= 32 so
    # the 'parallel' axis can shard across v7x's two TensorCores.
    tile_n = min(tile_n, _round_up(max(n, 16), 16))
    if n >= 32:
        tile_n = min(tile_n, _round_up(_round_up(n, 32) // 2, 16))
    n_pad = _round_up(n, tile_n)

    # K tile: largest 128-multiple divisor of f_pad that fits max_tile_k and the
    # VMEM budget (so x never needs K padding beyond the 128 tail, and step
    # overhead (~0.35 us/step) is amortized over big slabs).
    q = f_pad // 128
    tile_k = 128
    for d in range(min(q, max_tile_k // 128), 0, -1):
        if q % d == 0 and _vmem_bytes(tile_n, d * 128, h_pad, out_pad) <= _TILE_BUDGET_BYTES:
            tile_k = d * 128
            break

    # Pad x only when a ragged tail forces it; no dtype cast here (kernel casts).
    if n_pad != n or f_pad != f:
        x = jnp.pad(x, ((0, n_pad - n), (0, f_pad - f)))

    grid = (n_pad // tile_n, f_pad // tile_k)

    cost = pl.CostEstimate(
        flops=2 * n_pad * f_pad * h_pad + 2 * n_pad * h_pad * out_pad,
        transcendentals=0,
        bytes_accessed=(n_pad * f_pad * 4                       # x (f32)
                        + grid[0] * f_pad * h_pad * 2           # w1^T per batch tile
                        + (h_pad * out_pad + h_pad + out_pad) * 4
                        + n_pad * out_pad * 4))                 # output

    out = pl.pallas_call(
        _vae_encoder_kernel,
        out_shape=jax.ShapeDtypeStruct((n_pad, out_pad), jnp.float32),
        grid_spec=pltpu.PrefetchScalarGridSpec(
            num_scalar_prefetch=0,
            grid=grid,
            in_specs=[
                pl.BlockSpec((tile_n, tile_k), lambda i, k: (i, k)),   # x (f32)
                pl.BlockSpec((tile_k, h_pad), lambda i, k: (k, 0)),    # fc1 W^T slab
                # Constant-index operands are DMA'd once and kept resident; even
                # double-buffered they total < 70 KiB, so no pl.Buffered(1) needed.
                pl.BlockSpec((1, h_pad), lambda i, k: (0, 0)),         # fc1 bias
                pl.BlockSpec((h_pad, out_pad), lambda i, k: (0, 0)),   # head W^T (f32)
                pl.BlockSpec((1, out_pad), lambda i, k: (0, 0)),       # head bias
            ],
            out_specs=pl.BlockSpec((tile_n, out_pad), lambda i, k: (i, 0)),
            scratch_shapes=[pltpu.VMEM((tile_n, h_pad), jnp.float32)],
        ),
        compiler_params=pltpu.CompilerParams(
            dimension_semantics=("parallel", "arbitrary"),
            vmem_limit_bytes=_VMEM_LIMIT_BYTES),
        cost_estimate=cost,
    )(x, w1t, b1_p, wht, bh_p)

    mu = out[:n, :enc]
    logvar = out[:n, enc:2 * enc]
    return mu, logvar


def vae_encoder(x, w1, b1, w_mu, b_mu, w_var, b_var, **kw):
    """One-shot convenience wrapper (prep + forward).  For repeated calls,
    call prepare_encoder_params once and reuse the result."""
    params = prepare_encoder_params(w1, b1, w_mu, b_mu, w_var, b_var)
    return vae_encoder_fwd(x, params, **kw)


# ---------------------------------------------------------------------------
# Demo / self-test
# ---------------------------------------------------------------------------
def _init_linear(key, out_features, in_features):
    # Deterministic PyTorch-style uniform init: U(-1/sqrt(fan_in), 1/sqrt(fan_in))
    kw, kb = jax.random.split(key)
    bound = 1.0 / jnp.sqrt(in_features)
    w = jax.random.uniform(kw, (out_features, in_features), jnp.float32,
                           -bound, bound)
    b = jax.random.uniform(kb, (out_features,), jnp.float32, -bound, bound)
    return w, b


if __name__ == "__main__":
    img_size = 16
    encoding_dim = 32
    batch = 2
    input_size = 3 * img_size * img_size          # 768
    hidden = encoding_dim * 2                     # 64

    root = jax.random.PRNGKey(0)
    k_x, k_fc1, k_mu, k_var = jax.random.split(root, 4)

    # Input is the flattened NCHW image batch: (N, 3*H*W)
    x = jax.random.normal(k_x, (batch, input_size), jnp.float32)

    w1, b1 = _init_linear(k_fc1, hidden, input_size)
    w_mu, b_mu = _init_linear(k_mu, encoding_dim, hidden)
    w_var, b_var = _init_linear(k_var, encoding_dim, hidden)

    # Weight prep happens once; the hot path only streams x.
    params = prepare_encoder_params(w1, b1, w_mu, b_mu, w_var, b_var)
    fwd = jax.jit(lambda xx: vae_encoder_fwd(xx, params))

    mu, logvar = fwd(x)
    jax.block_until_ready((mu, logvar))

    # Pure-JAX f32 reference (same semantics as the PyTorch forward: no activations).
    # Tolerance loosened because fc1 runs bf16 operands with f32 accumulation.
    h1_ref = x @ w1.T + b1
    mu_ref = h1_ref @ w_mu.T + b_mu
    var_ref = h1_ref @ w_var.T + b_var
    assert mu.shape == (batch, encoding_dim) and logvar.shape == (batch, encoding_dim)
    assert jnp.allclose(mu, mu_ref, atol=2e-2, rtol=2e-2)
    assert jnp.allclose(logvar, var_ref, atol=2e-2, rtol=2e-2)

    print("KERNEL_OK")
</pallas_src>

<mosaic_0001>
module attributes {stable_mosaic.version = 11 : i64} {
  func.func @_vae_encoder_kernel(%arg0: i32, %arg1: i32, %arg2: memref<16x768xf32, #tpu.memory_space<vmem>>, %arg3: memref<768x128xbf16, #tpu.memory_space<vmem>>, %arg4: memref<1x128xf32, #tpu.memory_space<vmem>>, %arg5: memref<128x128xf32, #tpu.memory_space<vmem>>, %arg6: memref<1x128xf32, #tpu.memory_space<vmem>>, %arg7: memref<16x128xf32, #tpu.memory_space<vmem>>, %arg8: memref<16x128xf32, #tpu.memory_space<vmem>>) attributes {dimension_semantics = [#tpu.dimension_semantics<parallel>, #tpu.dimension_semantics<arbitrary>], iteration_bounds = array<i64: 1, 1>, scalar_prefetch = 0 : i64, scratch_operands = 1 : i64, tpu.core_type = #tpu.core_type<tc>, window_params = [{transform_indices = @transform_0, window_bounds = array<i64: 16, 768>}, {transform_indices = @transform_1, window_bounds = array<i64: 768, 128>}, {pipeline_mode = #tpu.pipeline_mode<synchronous>, transform_indices = @transform_2, window_bounds = array<i64: 1, 128>}, {pipeline_mode = #tpu.pipeline_mode<synchronous>, transform_indices = @transform_3, window_bounds = array<i64: 128, 128>}, {pipeline_mode = #tpu.pipeline_mode<synchronous>, transform_indices = @transform_4, window_bounds = array<i64: 1, 128>}, {transform_indices = @transform_5, window_bounds = array<i64: 16, 128>}]} {
    %c0_i32 = arith.constant 0 : i32
    %0 = arith.cmpi eq, %arg1, %c0_i32 : i32
    %1 = arith.extui %0 : i1 to i32
    %c0_i32_0 = arith.constant 0 : i32
    %2 = arith.cmpi ne, %1, %c0_i32_0 : i32
    scf.if %2 {
      %cst_10 = arith.constant 0.000000e+00 : f32
      %13 = vector.broadcast %cst_10 : f32 to vector<16x128xf32>
      %c0_11 = arith.constant 0 : index
      %c0_12 = arith.constant 0 : index
      %14 = vector.load %arg8[%c0_11, %c0_12] : memref<16x128xf32, #tpu.memory_space<vmem>>, vector<16x128xf32>
      tpu.vector_store %arg8[%c0_11, %c0_12], %13 {strides = array<i32>} : memref<16x128xf32, #tpu.memory_space<vmem>>, vector<16x128xf32>,
    } else {
    }
    %c0 = arith.constant 0 : index
    %c0_1 = arith.constant 0 : index
    %3 = vector.load %arg8[%c0, %c0_1] : memref<16x128xf32, #tpu.memory_space<vmem>>, vector<16x128xf32>
    %c0_2 = arith.constant 0 : index
    %c0_3 = arith.constant 0 : index
    %4 = vector.load %arg2[%c0_2, %c0_3] : memref<16x768xf32, #tpu.memory_space<vmem>>, vector<16x768xf32>
    %5 = arith.truncf %4 : vector<16x768xf32> to vector<16x768xbf16>
    %c0_4 = arith.constant 0 : index
    %c0_5 = arith.constant 0 : index
    %6 = vector.load %arg3[%c0_4, %c0_5] : memref<768x128xbf16, #tpu.memory_space<vmem>>, vector<768x128xbf16>
    %cst = arith.constant dense<0.000000e+00> : vector<16x128xf32>
    %7 = tpu.matmul %5, %6, %cst {dimension_numbers = #tpu.dot_dimension_numbers<[1], [0], [0], [1], [0, 0, 1, 1], [], []>} : vector<16x768xbf16>, vector<768x128xbf16>, vector<16x128xf32> -> vector<16x128xf32>
    %8 = arith.addf %3, %7 : vector<16x128xf32>
    %c0_6 = arith.constant 0 : index
    %c0_7 = arith.constant 0 : index
    %9 = vector.load %arg8[%c0_6, %c0_7] : memref<16x128xf32, #tpu.memory_space<vmem>>, vector<16x128xf32>
    tpu.vector_store %arg8[%c0_6, %c0_7], %8 {strides = array<i32>} : memref<16x128xf32, #tpu.memory_space<vmem>>, vector<16x128xf32>,
    %c0_i32_8 = arith.constant 0 : i32
    %10 = arith.cmpi eq, %arg1, %c0_i32_8 : i32
    %11 = arith.extui %10 : i1 to i32
    %c0_i32_9 = arith.constant 0 : i32
    %12 = arith.cmpi ne, %11, %c0_i32_9 : i32
    scf.if %12 {
      %c0_10 = arith.constant 0 : index
      %c0_11 = arith.constant 0 : index
      %13 = vector.load %arg8[%c0_10, %c0_11] : memref<16x128xf32, #tpu.memory_space<vmem>>, vector<16x128xf32>
      %c0_12 = arith.constant 0 : index
      %c0_13 = arith.constant 0 : index
      %14 = vector.load %arg4[%c0_12, %c0_13] : memref<1x128xf32, #tpu.memory_space<vmem>>, vector<1x128xf32>
      %15 = vector.broadcast %14 : vector<1x128xf32> to vector<16x128xf32>
      %16 = arith.addf %13, %15 : vector<16x128xf32>
      %c0_14 = arith.constant 0 : index
      %c0_15 = arith.constant 0 : index
      %17 = vector.load %arg5[%c0_14, %c0_15] : memref<128x128xf32, #tpu.memory_space<vmem>>, vector<128x128xf32>
      %cst_16 = arith.constant dense<0.000000e+00> : vector<16x128xf32>
      %18 = tpu.matmul %16, %17, %cst_16 {dimension_numbers = #tpu.dot_dimension_numbers<[1], [0], [0], [1], [0, 0, 1, 1], [], []>} : vector<16x128xf32>, vector<128x128xf32>, vector<16x128xf32> -> vector<16x128xf32>
      %c0_17 = arith.constant 0 : index
      %c0_18 = arith.constant 0 : index
      %19 = vector.load %arg6[%c0_17, %c0_18] : memref<1x128xf32, #tpu.memory_space<vmem>>, vector<1x128xf32>
      %20 = vector.broadcast %19 : vector<1x128xf32> to vector<16x128xf32>
      %21 = arith.addf %18, %20 : vector<16x128xf32>
      %c0_19 = arith.constant 0 : index
      %c0_20 = arith.constant 0 : index
      %22 = vector.load %arg7[%c0_19, %c0_20] : memref<16x128xf32, #tpu.memory_space<vmem>>, vector<16x128xf32>
      tpu.vector_store %arg7[%c0_19, %c0_20], %21 {strides = array<i32>} : memref<16x128xf32, #tpu.memory_space<vmem>>, vector<16x128xf32>,
    } else {
    }
    return
  }
  func.func @transform_0(%arg0: i32, %arg1: i32) -> (i32, i32) {
    %c0_i32 = arith.constant 0 : i32
    return %arg0, %arg1 : i32, i32
  }
  func.func @transform_1(%arg0: i32, %arg1: i32) -> (i32, i32) {
    %c0_i32 = arith.constant 0 : i32
    %c0_i32_0 = arith.constant 0 : i32
    return %arg1, %c0_i32 : i32, i32
  }
  func.func @transform_2(%arg0: i32, %arg1: i32) -> (i32, i32) {
    %c0_i32 = arith.constant 0 : i32
    %c0_i32_0 = arith.constant 0 : i32
    %c0_i32_1 = arith.constant 0 : i32
    return %c0_i32, %c0_i32_0 : i32, i32
  }
  func.func @transform_3(%arg0: i32, %arg1: i32) -> (i32, i32) {
    %c0_i32 = arith.constant 0 : i32
    %c0_i32_0 = arith.constant 0 : i32
    %c0_i32_1 = arith.constant 0 : i32
    return %c0_i32, %c0_i32_0 : i32, i32
  }
  func.func @transform_4(%arg0: i32, %arg1: i32) -> (i32, i32) {
    %c0_i32 = arith.constant 0 : i32
    %c0_i32_0 = arith.constant 0 : i32
    %c0_i32_1 = arith.constant 0 : i32
    return %c0_i32, %c0_i32_0 : i32, i32
  }
  func.func @transform_5(%arg0: i32, %arg1: i32) -> (i32, i32) {
    %c0_i32 = arith.constant 0 : i32
    %c0_i32_0 = arith.constant 0 : i32
    return %arg0, %c0_i32 : i32, i32
  }
}

</mosaic_0001>

<llo_original>
// kernel: _lambda_.1
$region0: #{_lambda_.1}
  #allocation0 [shape = 'u32[]', space=smem, size = 0x4, offset = 0x4, fixed_abs, tag = 'smem constant byte address 0x4 - core index']
  #allocation1 [shape = 'u32[144,128]{1,0:T(1,128)}', space=vmem, size = 0x12000, scoped, tag = 'internal scratch']
  #allocation2 [shape = 'f32[16,128]{1,0:T(8,128)}', space=vmem, size = 0x2000, scoped, tag = 'scratch operand']
  %s0 = inlined_call_operand.vmem [shape: f32[16,768], index: 0, kind: input, shape index: {}]
  %s1 = inlined_call_operand.hbm [shape: bf16[768,128], index: 1, kind: input, shape index: {}]
  %s2 = inlined_call_operand.vmem [shape: f32[1,128], index: 2, kind: input, shape index: {}]
  %s3 = inlined_call_operand.hbm [shape: f32[128,128], index: 3, kind: input, shape index: {}]
  %s4 = inlined_call_operand.vmem [shape: f32[1,128], index: 4, kind: input, shape index: {}]
  %s5 = inlined_call_operand.vmem [shape: f32[16,128], index: 5, kind: output, shape index: {}]
  %s6 = sld [smem:[#allocation0]]
  $region46: #{_lambda_.1} parent=0
    _
  %s8 = ssub.s32 1, %s6
  %s9 = scalar_select 0, %s8, %s6
  $region1: #{_lambda_.1} parent=0
    #allocation3 [shape = 'u8[196608]{0}', space=vmem, size = 0x30000, scoped, tag = 'input window, operand 1, single buffered']
    #allocation4 [shape = 's32[1]{0}', space=sflag, size = 0x4, scoped, tag = 'scoped memory for _lambda_.1']
    #allocation5 [shape = 'u8[65536]{0}', space=vmem, size = 0x10000, scoped, tag = 'input window, operand 3, single buffered']
    #allocation6 [shape = 's32[1]{0}', space=sflag, size = 0x4, scoped, tag = 'scoped memory for _lambda_.1']
    %10 = vsyncpa [#allocation4], 0
    %11 = vsyncpa [#allocation6], 0
    // Predicated region
    $region2: #{_lambda_.1} parent=1 // pred_check
      _
    $region3: #{_lambda_.1} parent=1 // pred_check_branch
      %13 = sbr.rel (0) target = $region5
    $region4: #{_lambda_.1} parent=1 // pred_region
      _
    $region5: #{_lambda_.1} parent=1 // pred_fallthru
      _
    // Predicated region
    $region6: #{_lambda_.1} parent=1 // pred_check
      _
    $region7: #{_lambda_.1} parent=1 // pred_check_branch
      %15 = sbr.rel (0) target = $region9
    $region8: #{_lambda_.1} parent=1 // pred_region
      %s17 = ssub.s32 6144, 6144
      %18 = vsyncadd [#allocation4], %s17
      %s19 = sshll.u32 [#allocation3], 4
      %s20 = int_to_ptr.vmem [resolvable:$true] %s19
      %25 = dma.hbm_to_vmem [thread:$0]  %s1, 6144, %s20, [#allocation4], 64, 64, 4
    $region9: #{_lambda_.1} parent=1 // pred_fallthru
      _
    // Predicated region
    $region10: #{_lambda_.1} parent=1 // pred_check
      _
    $region11: #{_lambda_.1} parent=1 // pred_check_branch
      %27 = sbr.rel (0) target = $region13
    $region12: #{_lambda_.1} parent=1 // pred_region
      _
    $region13: #{_lambda_.1} parent=1 // pred_fallthru
      _
    // Predicated region
    $region14: #{_lambda_.1} parent=1 // pred_check
      _
    $region15: #{_lambda_.1} parent=1 // pred_check_branch
      %29 = sbr.rel (0) target = $region17
    $region16: #{_lambda_.1} parent=1 // pred_region
      %s31 = ssub.s32 2048, 2048
      %32 = vsyncadd [#allocation6], %s31
      %s33 = sshll.u32 [#allocation5], 4
      %s34 = int_to_ptr.vmem [resolvable:$true] %s33
      %39 = dma.hbm_to_vmem [thread:$0]  %s3, 2048, %s34, [#allocation6], 128, 128, 8
    $region17: #{_lambda_.1} parent=1 // pred_fallthru
      _
    // Predicated region
    $region18: #{_lambda_.1} parent=1 // pred_check
      _
    $region19: #{_lambda_.1} parent=1 // pred_check_branch
      %41 = sbr.rel (0) target = $region21
    $region20: #{_lambda_.1} parent=1 // pred_region
      _
    $region21: #{_lambda_.1} parent=1 // pred_fallthru
      _
    // Predicated region
    $region22: #{_lambda_.1} parent=1 // pred_check
      _
    $region23: #{_lambda_.1} parent=1 // pred_check_branch
      %43 = sbr.rel (0) target = $region25
    $region24: #{_lambda_.1} parent=1 // pred_region
      %44 = dma.done [#allocation4], 6144
    $region25: #{_lambda_.1} parent=1 // pred_fallthru
      _
    // Predicated region
    $region26: #{_lambda_.1} parent=1 // pred_check
      _
    $region27: #{_lambda_.1} parent=1 // pred_check_branch
      %46 = sbr.rel (0) target = $region29
    $region28: #{_lambda_.1} parent=1 // pred_region
      %47 = dma.done [#allocation6], 2048
    $region29: #{_lambda_.1} parent=1 // pred_fallthru
      _
    %p49 = scmp.eq.s32.totalorder 0, 0
    // Predicated region
    $region30: #{_lambda_.1} parent=1 // pred_check
      %p50 = pneg %p49
    $region31: #{_lambda_.1} parent=1 // pred_check_branch
      %52 = sbr.rel (%p50) target = $region33
    $region32: #{_lambda_.1} parent=1 // pred_region
      %53 = vst [vmem:[#allocation2] sm:$0xff] 0.0
      %54 = vst [vmem:[#allocation2 + $0x8] sm:$0xff] 0.0
    $region33: #{_lambda_.1} parent=1 // pred_fallthru
      _
    %v55 = vld [vmem:[#allocation2] sm:$0xff]
    %v56 = vld [vmem:[#allocation2 + $0x8] sm:$0xff]
    %v57 = vld [vmem:[%s0] sm:$0xff]
    %v58 = vld [vmem:[%s0 + $0x8] sm:$0xff]
    %v59 = vld [vmem:[%s0 + $0x10] sm:$0xff]
    %v60 = vld [vmem:[%s0 + $0x18] sm:$0xff]
    %v61 = vld [vmem:[%s0 + $0x20] sm:$0xff]
    %v62 = vld [vmem:[%s0 + $0x28] sm:$0xff]
    %v63 = vld [vmem:[%s0 + $0x30] sm:$0xff]
    %v64 = vld [vmem:[%s0 + $0x38] sm:$0xff]
    %v65 = vld [vmem:[%s0 + $0x40] sm:$0xff]
    %v66 = vld [vmem:[%s0 + $0x48] sm:$0xff]
    %v67 = vld [vmem:[%s0 + $0x50] sm:$0xff]
    %v68 = vld [vmem:[%s0 + $0x58] sm:$0xff]
    %v69 = vpack.c.bf16 %v63, %v57
    %v70 = vpack.c.bf16 %v64, %v58
    %v71 = vpack.c.bf16 %v65, %v59
    %v72 = vpack.c.bf16 %v66, %v60
    %v73 = vpack.c.bf16 %v67, %v61
    %v74 = vpack.c.bf16 %v68, %v62
    %v75 = vld [vmem:[#allocation3] sm:$0xf]
    %v76 = vld [vmem:[#allocation3 + $0x4] sm:$0xf]
    %v77 = vld [vmem:[#allocation3 + $0x8] sm:$0xf]
    %v78 = vld [vmem:[#allocation3 + $0xc] sm:$0xf]
    %v79 = vld [vmem:[#allocation3 + $0x10] sm:$0xf]
    %v80 = vld [vmem:[#allocation3 + $0x14] sm:$0xf]
    %v81 = vld [vmem:[#allocation3 + $0x18] sm:$0xf]
    %v82 = vld [vmem:[#allocation3 + $0x1c] sm:$0xf]
    %v83 = vld [vmem:[#allocation3 + $0x20] sm:$0xf]
    %v84 = vld [vmem:[#allocation3 + $0x24] sm:$0xf]
    %v85 = vld [vmem:[#allocation3 + $0x28] sm:$0xf]
    %v86 = vld [vmem:[#allocation3 + $0x2c] sm:$0xf]
    %v87 = vld [vmem:[#allocation3 + $0x30] sm:$0xf]
    %v88 = vld [vmem:[#allocation3 + $0x34] sm:$0xf]
    %v89 = vld [vmem:[#allocation3 + $0x38] sm:$0xf]
    %v90 = vld [vmem:[#allocation3 + $0x3c] sm:$0xf]
    %v91 = vld [vmem:[#allocation3 + $0x40] sm:$0xf]
    %v92 = vld [vmem:[#allocation3 + $0x44] sm:$0xf]
    %v93 = vld [vmem:[#allocation3 + $0x48] sm:$0xf]
    %v94 = vld [vmem:[#allocation3 + $0x4c] sm:$0xf]
    %v95 = vld [vmem:[#allocation3 + $0x50] sm:$0xf]
    %v96 = vld [vmem:[#allocation3 + $0x54] sm:$0xf]
    %v97 = vld [vmem:[#allocation3 + $0x58] sm:$0xf]
    %v98 = vld [vmem:[#allocation3 + $0x5c] sm:$0xf]
    %v99 = vld [vmem:[#allocation3 + $0x60] sm:$0xf]
    %v100 = vld [vmem:[#allocation3 + $0x64] sm:$0xf]
    %v101 = vld [vmem:[#allocation3 + $0x68] sm:$0xf]
    %v102 = vld [vmem:[#allocation3 + $0x6c] sm:$0xf]
    %v103 = vld [vmem:[#allocation3 + $0x70] sm:$0xf]
    %v104 = vld [vmem:[#allocation3 + $0x74] sm:$0xf]
    %v105 = vld [vmem:[#allocation3 + $0x78] sm:$0xf]
    %v106 = vld [vmem:[#allocation3 + $0x7c] sm:$0xf]
    %v107 = vld [vmem:[#allocation3 + $0x80] sm:$0xf]
    %v108 = vld [vmem:[#allocation3 + $0x84] sm:$0xf]
    %v109 = vld [vmem:[#allocation3 + $0x88] sm:$0xf]
    %v110 = vld [vmem:[#allocation3 + $0x8c] sm:$0xf]
    %v111 = vld [vmem:[#allocation3 + $0x90] sm:$0xf]
    %v112 = vld [vmem:[#allocation3 + $0x94] sm:$0xf]
    %v113 = vld [vmem:[#allocation3 + $0x98] sm:$0xf]
    %v114 = vld [vmem:[#allocation3 + $0x9c] sm:$0xf]
    %v115 = vld [vmem:[#allocation3 + $0xa0] sm:$0xf]
    %v116 = vld [vmem:[#allocation3 + $0xa4] sm:$0xf]
    %v117 = vld [vmem:[#allocation3 + $0xa8] sm:$0xf]
    %v118 = vld [vmem:[#allocation3 + $0xac] sm:$0xf]
    %v119 = vld [vmem:[#allocation3 + $0xb0] sm:$0xf]
    %v120 = vld [vmem:[#allocation3 + $0xb4] sm:$0xf]
    %v121 = vld [vmem:[#allocation3 + $0xb8] sm:$0xf]
    %v122 = vld [vmem:[#allocation3 + $0xbc] sm:$0xf]
    %v123 = vld [vmem:[#allocation3 + $0xc0] sm:$0xf]
    %v124 = vld [vmem:[#allocation3 + $0xc4] sm:$0xf]
    %v125 = vld [vmem:[#allocation3 + $0xc8] sm:$0xf]
    %v126 = vld [vmem:[#allocation3 + $0xcc] sm:$0xf]
    %v127 = vld [vmem:[#allocation3 + $0xd0] sm:$0xf]
    %v128 = vld [vmem:[#allocation3 + $0xd4] sm:$0xf]
    %v129 = vld [vmem:[#allocation3 + $0xd8] sm:$0xf]
    %v130 = vld [vmem:[#allocation3 + $0xdc] sm:$0xf]
    %v131 = vld [vmem:[#allocation3 + $0xe0] sm:$0xf]
    %v132 = vld [vmem:[#allocation3 + $0xe4] sm:$0xf]
    %v133 = vld [vmem:[#allocation3 + $0xe8] sm:$0xf]
    %v134 = vld [vmem:[#allocation3 + $0xec] sm:$0xf]
    %v135 = vld [vmem:[#allocation3 + $0xf0] sm:$0xf]
    %v136 = vld [vmem:[#allocation3 + $0xf4] sm:$0xf]
    %v137 = vld [vmem:[#allocation3 + $0xf8] sm:$0xf]
    %v138 = vld [vmem:[#allocation3 + $0xfc] sm:$0xf]
    %v139 = vld [vmem:[#allocation3 + $0x100] sm:$0xf]
    %v140 = vld [vmem:[#allocation3 + $0x104] sm:$0xf]
    %v141 = vld [vmem:[#allocation3 + $0x108] sm:$0xf]
    %v142 = vld [vmem:[#allocation3 + $0x10c] sm:$0xf]
    %v143 = vld [vmem:[#allocation3 + $0x110] sm:$0xf]
    %v144 = vld [vmem:[#allocation3 + $0x114] sm:$0xf]
    %v145 = vld [vmem:[#allocation3 + $0x118] sm:$0xf]
    %v146 = vld [vmem:[#allocation3 + $0x11c] sm:$0xf]
    %v147 = vld [vmem:[#allocation3 + $0x120] sm:$0xf]
    %v148 = vld [vmem:[#allocation3 + $0x124] sm:$0xf]
    %v149 = vld [vmem:[#allocation3 + $0x128] sm:$0xf]
    %v150 = vld [vmem:[#allocation3 + $0x12c] sm:$0xf]
    %v151 = vld [vmem:[#allocation3 + $0x130] sm:$0xf]
    %v152 = vld [vmem:[#allocation3 + $0x134] sm:$0xf]
    %v153 = vld [vmem:[#allocation3 + $0x138] sm:$0xf]
    %v154 = vld [vmem:[#allocation3 + $0x13c] sm:$0xf]
    %v155 = vld [vmem:[#allocation3 + $0x140] sm:$0xf]
    %v156 = vld [vmem:[#allocation3 + $0x144] sm:$0xf]
    %v157 = vld [vmem:[#allocation3 + $0x148] sm:$0xf]
    %v158 = vld [vmem:[#allocation3 + $0x14c] sm:$0xf]
    %v159 = vld [vmem:[#allocation3 + $0x150] sm:$0xf]
    %v160 = vld [vmem:[#allocation3 + $0x154] sm:$0xf]
    %v161 = vld [vmem:[#allocation3 + $0x158] sm:$0xf]
    %v162 = vld [vmem:[#allocation3 + $0x15c] sm:$0xf]
    %v163 = vld [vmem:[#allocation3 + $0x160] sm:$0xf]
    %v164 = vld [vmem:[#allocation3 + $0x164] sm:$0xf]
    %v165 = vld [vmem:[#allocation3 + $0x168] sm:$0xf]
    %v166 = vld [vmem:[#allocation3 + $0x16c] sm:$0xf]
    %v167 = vld [vmem:[#allocation3 + $0x170] sm:$0xf]
    %v168 = vld [vmem:[#allocation3 + $0x174] sm:$0xf]
    %v169 = vld [vmem:[#allocation3 + $0x178] sm:$0xf]
    %v170 = vld [vmem:[#allocation3 + $0x17c] sm:$0xf]
    %v267 = vunpack.c.l.b16 %v75
    %v268 = vunpack.c.l.b16 %v76
    %v269 = vunpack.c.l.b16 %v77
    %v270 = vunpack.c.l.b16 %v78
    %v271 = vunpack.c.l.b16 %v79
    %v272 = vunpack.c.l.b16 %v80
    %v273 = vunpack.c.l.b16 %v81
    %v274 = vunpack.c.l.b16 %v82
    %v275 = vunpack.c.l.b16 %v83
    %v276 = vunpack.c.l.b16 %v84
    %v277 = vunpack.c.l.b16 %v85
    %v278 = vunpack.c.l.b16 %v86
    %v279 = vunpack.c.l.b16 %v87
    %v280 = vunpack.c.l.b16 %v88
    %v281 = vunpack.c.l.b16 %v89
    %v282 = vunpack.c.l.b16 %v90
    %v283 = vunpack.c.l.b16 %v91
    %v284 = vunpack.c.l.b16 %v92
    %v285 = vunpack.c.l.b16 %v93
    %v286 = vunpack.c.l.b16 %v94
    %v287 = vunpack.c.l.b16 %v95
    %v288 = vunpack.c.l.b16 %v96
    %v289 = vunpack.c.l.b16 %v97
    %v290 = vunpack.c.l.b16 %v98
    %v291 = vunpack.c.l.b16 %v99
    %v292 = vunpack.c.l.b16 %v100
    %v293 = vunpack.c.l.b16 %v101
    %v294 = vunpack.c.l.b16 %v102
    %v295 = vunpack.c.l.b16 %v103
    %v296 = vunpack.c.l.b16 %v104
    %v297 = vunpack.c.l.b16 %v105
    %v298 = vunpack.c.l.b16 %v106
    %v299 = vunpack.c.l.b16 %v107
    %v300 = vunpack.c.l.b16 %v108
    %v301 = vunpack.c.l.b16 %v109
    %v302 = vunpack.c.l.b16 %v110
    %v303 = vunpack.c.l.b16 %v111
    %v304 = vunpack.c.l.b16 %v112
    %v305 = vunpack.c.l.b16 %v113
    %v306 = vunpack.c.l.b16 %v114
    %v307 = vunpack.c.l.b16 %v115
    %v308 = vunpack.c.l.b16 %v116
    %v309 = vunpack.c.l.b16 %v117
    %v310 = vunpack.c.l.b16 %v118
    %v311 = vunpack.c.l.b16 %v119
    %v312 = vunpack.c.l.b16 %v120
    %v313 = vunpack.c.l.b16 %v121
    %v314 = vunpack.c.l.b16 %v122
    %v315 = vunpack.c.l.b16 %v123
    %v316 = vunpack.c.l.b16 %v124
    %v317 = vunpack.c.l.b16 %v125
    %v318 = vunpack.c.l.b16 %v126
    %v319 = vunpack.c.l.b16 %v127
    %v320 = vunpack.c.l.b16 %v128
    %v321 = vunpack.c.l.b16 %v129
    %v322 = vunpack.c.l.b16 %v130
    %v323 = vunpack.c.l.b16 %v131
    %v324 = vunpack.c.l.b16 %v132
    %v325 = vunpack.c.l.b16 %v133
    %v326 = vunpack.c.l.b16 %v134
    %v327 = vunpack.c.l.b16 %v135
    %v328 = vunpack.c.l.b16 %v136
    %v329 = vunpack.c.l.b16 %v137
    %v330 = vunpack.c.l.b16 %v138
    %v331 = vunpack.c.l.b16 %v139
    %v332 = vunpack.c.l.b16 %v140
    %v333 = vunpack.c.l.b16 %v141
    %v334 = vunpack.c.l.b16 %v142
    %v335 = vunpack.c.l.b16 %v143
    %v336 = vunpack.c.l.b16 %v144
    %v337 = vunpack.c.l.b16 %v145
    %v338 = vunpack.c.l.b16 %v146
    %v339 = vunpack.c.l.b16 %v147
    %v340 = vunpack.c.l.b16 %v148
    %v341 = vunpack.c.l.b16 %v149
    %v342 = vunpack.c.l.b16 %v150
    %v343 = vunpack.c.l.b16 %v151
    %v344 = vunpack.c.l.b16 %v152
    %v345 = vunpack.c.l.b16 %v153
    %v346 = vunpack.c.l.b16 %v154
    %v347 = vunpack.c.l.b16 %v155
    %v348 = vunpack.c.l.b16 %v156
    %v349 = vunpack.c.l.b16 %v157
    %v350 = vunpack.c.l.b16 %v158
    %v351 = vunpack.c.l.b16 %v159
    %v352 = vunpack.c.l.b16 %v160
    %v353 = vunpack.c.l.b16 %v161
    %v354 = vunpack.c.l.b16 %v162
    %v355 = vunpack.c.l.b16 %v163
    %v356 = vunpack.c.l.b16 %v164
    %v357 = vunpack.c.l.b16 %v165
    %v358 = vunpack.c.l.b16 %v166
    %v359 = vunpack.c.l.b16 %v167
    %v360 = vunpack.c.l.b16 %v168
    %v361 = vunpack.c.l.b16 %v169
    %v362 = vunpack.c.l.b16 %v170
    %v363 = vpack.c.b16 %v268, %v267
    %v364 = vpack.c.b16 %v270, %v269
    %v365 = vpack.c.b16 %v272, %v271
    %v366 = vpack.c.b16 %v274, %v273
    %v367 = vpack.c.b16 %v276, %v275
    %v368 = vpack.c.b16 %v278, %v277
    %v369 = vpack.c.b16 %v280, %v279
    %v370 = vpack.c.b16 %v282, %v281
    %v371 = vpack.c.b16 %v284, %v283
    %v372 = vpack.c.b16 %v286, %v285
    %v373 = vpack.c.b16 %v288, %v287
    %v374 = vpack.c.b16 %v290, %v289
    %v375 = vpack.c.b16 %v292, %v291
    %v376 = vpack.c.b16 %v294, %v293
    %v377 = vpack.c.b16 %v296, %v295
    %v378 = vpack.c.b16 %v298, %v297
    %v379 = vpack.c.b16 %v300, %v299
    %v380 = vpack.c.b16 %v302, %v301
    %v381 = vpack.c.b16 %v304, %v303
    %v382 = vpack.c.b16 %v306, %v305
    %v383 = vpack.c.b16 %v308, %v307
    %v384 = vpack.c.b16 %v310, %v309
    %v385 = vpack.c.b16 %v312, %v311
    %v386 = vpack.c.b16 %v314, %v313
    %v387 = vpack.c.b16 %v316, %v315
    %v388 = vpack.c.b16 %v318, %v317
    %v389 = vpack.c.b16 %v320, %v319
    %v390 = vpack.c.b16 %v322, %v321
    %v391 = vpack.c.b16 %v324, %v323
    %v392 = vpack.c.b16 %v326, %v325
    %v393 = vpack.c.b16 %v328, %v327
    %v394 = vpack.c.b16 %v330, %v329
    %v395 = vpack.c.b16 %v332, %v331
    %v396 = vpack.c.b16 %v334, %v333
    %v397 = vpack.c.b16 %v336, %v335
    %v398 = vpack.c.b16 %v338, %v337
    %v399 = vpack.c.b16 %v340, %v339
    %v400 = vpack.c.b16 %v342, %v341
    %v401 = vpack.c.b16 %v344, %v343
    %v402 = vpack.c.b16 %v346, %v345
    %v403 = vpack.c.b16 %v348, %v347
    %v404 = vpack.c.b16 %v350, %v349
    %v405 = vpack.c.b16 %v352, %v351
    %v406 = vpack.c.b16 %v354, %v353
    %v407 = vpack.c.b16 %v356, %v355
    %v408 = vpack.c.b16 %v358, %v357
    %v409 = vpack.c.b16 %v360, %v359
    %v410 = vpack.c.b16 %v362, %v361
    %459 = vmatprep.subr.bf16.mxu0 0
    %460 = vmatpush1.bf16.msra.mxu0 %v363
    %461 = vmatprep.subr.bf16.mxu0 0
    %462 = vmatpush1.bf16.msra.mxu0 %v364
    %463 = vmatprep.subr.bf16.mxu0 0
    %464 = vmatpush1.bf16.msra.mxu0 %v365
    %465 = vmatprep.subr.bf16.mxu0 0
    %466 = vmatpush1.bf16.msra.mxu0 %v366
    %467 = vmatprep.subr.bf16.mxu0 0
    %468 = vmatpush1.bf16.msra.mxu0 %v367
    %469 = vmatprep.subr.bf16.mxu0 0
    %470 = vmatpush1.bf16.msra.mxu0 %v368
    %471 = vmatprep.subr.bf16.mxu0 0
    %472 = vmatpush1.bf16.msra.mxu0 %v369
    %473 = vmatprep.subr.bf16.mxu0 0
    %474 = vmatpush1.bf16.msra.mxu0 %v370
    %475 = vmatprep.subr.bf16.mxu0 0
    %476 = vmatpush1.bf16.msra.mxu0 %v371
    %477 = vmatprep.subr.bf16.mxu0 0
    %478 = vmatpush1.bf16.msra.mxu0 %v372
    %479 = vmatprep.subr.bf16.mxu0 0
    %480 = vmatpush1.bf16.msra.mxu0 %v373
    %481 = vmatprep.subr.bf16.mxu0 0
    %482 = vmatpush1.bf16.msra.mxu0 %v374
    %483 = vmatprep.subr.bf16.mxu0 0
    %484 = vmatpush1.bf16.msra.mxu0 %v375
    %485 = vmatprep.subr.bf16.mxu0 0
    %486 = vmatpush1.bf16.msra.mxu0 %v376
    %487 = vmatprep.subr.bf16.mxu0 0
    %488 = vmatpush1.bf16.msra.mxu0 %v377
    %489 = vmatprep.subr.bf16.mxu0 0
    %490 = vmatpush1.bf16.msra.mxu0 %v378
    %491 = vmatprep.mubr.bf16.mxu0 %v70
    %492 = vmatmul.mubr.bf16.gmra.mrb[0].mxu0 %v69
    %v493 = vpop.f32.mrb[0].mxu0
    %v494 = vadd.f32 0.0, %v493
    %v495 = vpop.f32.mrb[0].mxu0
    %v496 = vpop.f32.mrb[0].mxu0
    %v497 = vadd.f32 0.0, %v496
    %v498 = vpop.f32.mrb[0].mxu0
    %499 = vdwg.mxu0
    %500 = vmatprep.subr.bf16.mxu0 0
    %501 = vmatpush1.bf16.msra.mxu0 %v379
    %502 = vmatprep.subr.bf16.mxu0 0
    %503 = vmatpush1.bf16.msra.mxu0 %v380
    %504 = vmatprep.subr.bf16.mxu0 0
    %505 = vmatpush1.bf16.msra.mxu0 %v381
    %506 = vmatprep.subr.bf16.mxu0 0
    %507 = vmatpush1.bf16.msra.mxu0 %v382
    %508 = vmatprep.subr.bf16.mxu0 0
    %509 = vmatpush1.bf16.msra.mxu0 %v383
    %510 = vmatprep.subr.bf16.mxu0 0
    %511 = vmatpush1.bf16.msra.mxu0 %v384
    %512 = vmatprep.subr.bf16.mxu0 0
    %513 = vmatpush1.bf16.msra.mxu0 %v385
    %514 = vmatprep.subr.bf16.mxu0 0
    %515 = vmatpush1.bf16.msra.mxu0 %v386
    %516 = vmatprep.subr.bf16.mxu0 0
    %517 = vmatpush1.bf16.msra.mxu0 %v387
    %518 = vmatprep.subr.bf16.mxu0 0
    %519 = vmatpush1.bf16.msra.mxu0 %v388
    %520 = vmatprep.subr.bf16.mxu0 0
    %521 = vmatpush1.bf16.msra.mxu0 %v389
    %522 = vmatprep.subr.bf16.mxu0 0
    %523 = vmatpush1.bf16.msra.mxu0 %v390
    %524 = vmatprep.subr.bf16.mxu0 0
    %525 = vmatpush1.bf16.msra.mxu0 %v391
    %526 = vmatprep.subr.bf16.mxu0 0
    %527 = vmatpush1.bf16.msra.mxu0 %v392
    %528 = vmatprep.subr.bf16.mxu0 0
    %529 = vmatpush1.bf16.msra.mxu0 %v393
    %530 = vmatprep.subr.bf16.mxu0 0
    %531 = vmatpush1.bf16.msra.mxu0 %v394
    %532 = vmatprep.mubr.bf16.mxu0 %v72
    %533 = vmatmul.mubr.bf16.gmra.mrb[0].mxu0 %v71
    %v534 = vpop.f32.mrb[0].mxu0
    %v535 = vadd.f32 %v494, %v534
    %v536 = vpop.f32.mrb[0].mxu0
    %v537 = vpop.f32.mrb[0].mxu0
    %v538 = vadd.f32 %v497, %v537
    %v539 = vpop.f32.mrb[0].mxu0
    %540 = vdwg.mxu0
    %541 = vmatprep.subr.bf16.mxu0 0
    %542 = vmatpush1.bf16.msra.mxu0 %v395
    %543 = vmatprep.subr.bf16.mxu0 0
    %544 = vmatpush1.bf16.msra.mxu0 %v396
    %545 = vmatprep.subr.bf16.mxu0 0
    %546 = vmatpush1.bf16.msra.mxu0 %v397
    %547 = vmatprep.subr.bf16.mxu0 0
    %548 = vmatpush1.bf16.msra.mxu0 %v398
    %549 = vmatprep.subr.bf16.mxu0 0
    %550 = vmatpush1.bf16.msra.mxu0 %v399
    %551 = vmatprep.subr.bf16.mxu0 0
    %552 = vmatpush1.bf16.msra.mxu0 %v400
    %553 = vmatprep.subr.bf16.mxu0 0
    %554 = vmatpush1.bf16.msra.mxu0 %v401
    %555 = vmatprep.subr.bf16.mxu0 0
    %556 = vmatpush1.bf16.msra.mxu0 %v402
    %557 = vmatprep.subr.bf16.mxu0 0
    %558 = vmatpush1.bf16.msra.mxu0 %v403
    %559 = vmatprep.subr.bf16.mxu0 0
    %560 = vmatpush1.bf16.msra.mxu0 %v404
    %561 = vmatprep.subr.bf16.mxu0 0
    %562 = vmatpush1.bf16.msra.mxu0 %v405
    %563 = vmatprep.subr.bf16.mxu0 0
    %564 = vmatpush1.bf16.msra.mxu0 %v406
    %565 = vmatprep.subr.bf16.mxu0 0
    %566 = vmatpush1.bf16.msra.mxu0 %v407
    %567 = vmatprep.subr.bf16.mxu0 0
    %568 = vmatpush1.bf16.msra.mxu0 %v408
    %569 = vmatprep.subr.bf16.mxu0 0
    %570 = vmatpush1.bf16.msra.mxu0 %v409
    %571 = vmatprep.subr.bf16.mxu0 0
    %572 = vmatpush1.bf16.msra.mxu0 %v410
    %573 = vmatprep.mubr.bf16.mxu0 %v74
    %574 = vmatmul.mubr.bf16.gmra.mrb[0].mxu0 %v73
    %v575 = vpop.f32.mrb[0].mxu0
    %v576 = vadd.f32 %v535, %v575
    %v577 = vpop.f32.mrb[0].mxu0
    %v578 = vpop.f32.mrb[0].mxu0
    %v579 = vadd.f32 %v538, %v578
    %v580 = vpop.f32.mrb[0].mxu0
    %581 = vdwg.mxu0
    %v582 = vadd.f32 %v55, %v576
    %v583 = vadd.f32 %v56, %v579
    %584 = vst [vmem:[#allocation2] sm:$0xff] %v582
    %585 = vst [vmem:[#allocation2 + $0x8] sm:$0xff] %v583
    // Predicated region
    $region34: #{_lambda_.1} parent=1 // pred_check
      %p586 = pneg %p49
    $region35: #{_lambda_.1} parent=1 // pred_check_branch
      %588 = sbr.rel (%p586) target = $region37
    $region36: #{_lambda_.1} parent=1 // pred_region
      %v589 = vld [vmem:[#allocation2] sm:$0xff]
      %v590 = vld [vmem:[#allocation2 + $0x8] sm:$0xff]
      %v591 = vld [vmem:[%s2] sm:$0x1]
      %v593 = vlaneseq
      %v594 = vshrl.u32 %v593, 7
      %v595 = vsub.s32 0, %v594
      %v596 = vrot.slane %v591, %v595
      %v598 = vadd.f32 %v589, %v596
      %v599 = vadd.f32 %v590, %v596
      %v600 = vld [vmem:[#allocation5] sm:$0xff]
      %v601 = vld [vmem:[#allocation5 + $0x8] sm:$0xff]
      %v602 = vld [vmem:[#allocation5 + $0x10] sm:$0xff]
      %v603 = vld [vmem:[#allocation5 + $0x18] sm:$0xff]
      %v604 = vld [vmem:[#allocation5 + $0x20] sm:$0xff]
      %v605 = vld [vmem:[#allocation5 + $0x28] sm:$0xff]
      %v606 = vld [vmem:[#allocation5 + $0x30] sm:$0xff]
      %v607 = vld [vmem:[#allocation5 + $0x38] sm:$0xff]
      %v608 = vld [vmem:[#allocation5 + $0x40] sm:$0xff]
      %v609 = vld [vmem:[#allocation5 + $0x48] sm:$0xff]
      %v610 = vld [vmem:[#allocation5 + $0x50] sm:$0xff]
      %v611 = vld [vmem:[#allocation5 + $0x58] sm:$0xff]
      %v612 = vld [vmem:[#allocation5 + $0x60] sm:$0xff]
      %v613 = vld [vmem:[#allocation5 + $0x68] sm:$0xff]
      %v614 = vld [vmem:[#allocation5 + $0x70] sm:$0xff]
      %v615 = vld [vmem:[#allocation5 + $0x78] sm:$0xff]
      %v616 = vld [vmem:[%s4] sm:$0x1]
      %v618 = vlaneseq
      %v619 = vshrl.u32 %v618, 7
      %v620 = vsub.s32 0, %v619
      %v621 = vrot.slane %v616, %v620
      %623 = vmatprep.subr.mxu0 0.0
      %624 = vmatpush1.msra.mxu0 %v600
      %625 = vmatprep.subr.mxu0 0.0
      %626 = vmatpush1.msra.mxu0 %v601
      %627 = vmatprep.subr.mxu0 0.0
      %628 = vmatpush1.msra.mxu0 %v602
      %629 = vmatprep.subr.mxu0 0.0
      %630 = vmatpush1.msra.mxu0 %v603
      %631 = vmatprep.subr.mxu0 0.0
      %632 = vmatpush1.msra.mxu0 %v604
      %633 = vmatprep.subr.mxu0 0.0
      %634 = vmatpush1.msra.mxu0 %v605
      %635 = vmatprep.subr.mxu0 0.0
      %636 = vmatpush1.msra.mxu0 %v606
      %637 = vmatprep.subr.mxu0 0.0
      %638 = vmatpush1.msra.mxu0 %v607
      %639 = vmatprep.subr.mxu0 0.0
      %640 = vmatpush1.msra.mxu0 %v608
      %641 = vmatprep.subr.mxu0 0.0
      %642 = vmatpush1.msra.mxu0 %v609
      %643 = vmatprep.subr.mxu0 0.0
      %644 = vmatpush1.msra.mxu0 %v610
      %645 = vmatprep.subr.mxu0 0.0
      %646 = vmatpush1.msra.mxu0 %v611
      %647 = vmatprep.subr.mxu0 0.0
      %648 = vmatpush1.msra.mxu0 %v612
      %649 = vmatprep.subr.mxu0 0.0
      %650 = vmatpush1.msra.mxu0 %v613
      %651 = vmatprep.subr.mxu0 0.0
      %652 = vmatpush1.msra.mxu0 %v614
      %653 = vmatprep.subr.mxu0 0.0
      %654 = vmatpush1.msra.mxu0 %v615
      %655 = vmatprep.subr.mxu0 0.0
      %656 = vmatpush1.msra.mxu0 0.0
      %657 = vmatprep.subr.mxu0 0.0
      %658 = vmatpush1.msra.mxu0 0.0
      %659 = vmatprep.subr.mxu0 0.0
      %660 = vmatpush1.msra.mxu0 0.0
      %661 = vmatprep.subr.mxu0 0.0
      %662 = vmatpush1.msra.mxu0 0.0
      %663 = vmatprep.subr.mxu0 0.0
      %664 = vmatpush1.msra.mxu0 0.0
      %665 = vmatprep.subr.mxu0 0.0
      %666 = vmatpush1.msra.mxu0 0.0
      %667 = vmatprep.subr.mxu0 0.0
      %668 = vmatpush1.msra.mxu0 0.0
      %669 = vmatprep.subr.mxu0 0.0
      %670 = vmatpush1.msra.mxu0 0.0
      %671 = vmatprep.subr.mxu0 0.0
      %672 = vmatpush1.msra.mxu0 0.0
      %673 = vmatprep.subr.mxu0 0.0
      %674 = vmatpush1.msra.mxu0 0.0
      %675 = vmatprep.subr.mxu0 0.0
      %676 = vmatpush1.msra.mxu0 0.0
      %677 = vmatprep.subr.mxu0 0.0
      %678 = vmatpush1.msra.mxu0 0.0
      %679 = vmatprep.subr.mxu0 0.0
      %680 = vmatpush1.msra.mxu0 0.0
      %681 = vmatprep.subr.mxu0 0.0
      %682 = vmatpush1.msra.mxu0 0.0
      %683 = vmatprep.subr.mxu0 0.0
      %684 = vmatpush1.msra.mxu0 0.0
      %685 = vmatprep.subr.mxu0 0.0
      %686 = vmatpush1.msra.mxu0 0.0
      %687 = vmatprep.mubr.f32.mxu0 0.0
      %688 = vmatmul.mubr.f32.gmra.mrb[0].mxu0 %v598
      %v689 = vpop.f32.mrb[0].mxu0
      %v690 = vadd.f32 %v621, %v689
      %v691 = vpop.f32.mrb[0].mxu0
      %692 = vmatprep.mubr.f32.mxu0 0.0
      %693 = vmatmul.mubr.f32.gmra.mrb[0].mxu0 %v599
      %v694 = vpop.f32.mrb[0].mxu0
      %v695 = vadd.f32 %v621, %v694
      %v696 = vpop.f32.mrb[0].mxu0
      %697 = vdwg.mxu0
      %698 = vst [vmem:[%s5] sm:$0xff] %v690
      %699 = vst [vmem:[%s5 + $0x8] sm:$0xff] %v695
    $region37: #{_lambda_.1} parent=1 // pred_fallthru
      _
    // Predicated region
    $region38: #{_lambda_.1} parent=1 // pred_check
      _
    $region39: #{_lambda_.1} parent=1 // pred_check_branch
      %701 = sbr.rel (0) target = $region41
    $region40: #{_lambda_.1} parent=1 // pred_region
      _
    $region41: #{_lambda_.1} parent=1 // pred_fallthru
      _
    // Predicated region
    $region42: #{_lambda_.1} parent=1 // pred_check
      _
    $region43: #{_lambda_.1} parent=1 // pred_check_branch
      %703 = sbr.rel (0) target = $region45
    $region44: #{_lambda_.1} parent=1 // pred_region
      _
    $region45: #{_lambda_.1} parent=1 // pred_fallthru
      _
    %704 = vsyncpa [#allocation4], 1
    %705 = vsyncpa [#allocation6], 1

</llo_original>
